<compile_context>
chip_gen: v7x
topology: tpu7x:2x2x1
jax: 0.10.0
libtpu: 0.0.40
codegen_flags: <defaults>
</compile_context>

<pallas_src>
import jax
import jax.numpy as jnp
from jax.experimental import pallas as pl
from jax.experimental.pallas import tpu as pltpu


def _rbf_kernel(x_ref, ct_ref, cn_ref, w_ref, b_ref, o_ref, *, neg_k):
    x = x_ref[...]                                           # (TB, D)
    xf = x.astype(jnp.float32)
    # Per-row -||x||^2 / (2 sigma^2): (TB, 1), cheap (VPU + XLU reduce).
    xn = neg_k * jnp.sum(xf * xf, axis=-1, keepdims=True)    # (TB, 1)

    # cross[b, c] = x[b, :] . centers[c, :] / sigma^2  (scale folded into ct in
    # the wrapper; natural (M,K)x(K,N) layout -> no in-kernel transpose).  MXU.
    cross = jnp.dot(x, ct_ref[...],
                    preferred_element_type=jnp.float32)      # (TB, C)

    # exponent = -dist / (2 sigma^2) = xn + cn_scaled + cross  <= 0  (no overflow)
    r = jnp.exp(cross + cn_ref[...] + xn)                    # (TB, C)  EUP

    # Output projection: (TB, C) @ (C, 3) + bias.  MXU.
    y = jnp.dot(r, w_ref[...], preferred_element_type=jnp.float32)   # (TB, 3)
    o_ref[...] = (y + b_ref[...]).astype(o_ref.dtype)


def _round_up(v, m):
    return ((v + m - 1) // m) * m


def rbf_layer(x, centers, weight_t, bias, sigma=1.0, max_rows_per_block=None):
    """x: (B, D); centers: (C, D); weight_t: (C, 3); bias: (1, 3) -> (B, 3) f32.

    sigma is baked in as a static Python float (retraces if it changes).
    """
    B, D = x.shape
    C = centers.shape[0]

    neg_k = -1.0 / (2.0 * float(sigma) * float(sigma))

    # Parameter prep: hoisted once (centers are parameters, not per-step data).
    centers_f = centers.astype(jnp.float32)
    centers_t_scaled = (centers_f * (-2.0 * neg_k)).T                    # (D, C)
    cn_scaled = (neg_k * jnp.sum(centers_f * centers_f, axis=-1))[None]  # (1, C)
    weight_t = weight_t.astype(jnp.float32)
    bias = bias.astype(jnp.float32)

    # --- VMEM budget / batch-tile sizing (per TPU generation) -----------------
    try:
        vmem_cap = int(pltpu.get_tpu_info().vmem_capacity_bytes)
    except Exception:
        vmem_cap = 64 * 1024 * 1024          # conservative (v7x-sized) fallback
    vmem_limit = min(int(0.75 * vmem_cap), 100 * 1024 * 1024)

    # Resident params (one buffer) + per-batch-row footprint:
    #   x double-buffer (2*D) + (tb, C) MXU out / exponent / exp result (~3*C).
    param_bytes = 4 * (D * C + C + 3 * C + 3)
    per_row_bytes = 4 * (2 * D + 3 * C + 2 * 3 + 8)
    budget = int(0.8 * vmem_limit) - 2 * param_bytes - (2 << 20)
    tb_fit = max(8, (max(budget, 0) // per_row_bytes) // 8 * 8)

    if B >= 8:
        tb = min(tb_fit, _round_up(B, 8))
        if max_rows_per_block is not None:
            tb = min(tb, max(8, (int(max_rows_per_block) // 8) * 8))
        if B >= 16:
            # Force >= 2 grid steps so the "parallel" axis can span both TCs on
            # v7x (one extra ~0.35us step on single-TC chips: negligible).
            tb = min(tb, _round_up((B + 1) // 2, 8))
        tb = max(8, (tb // 8) * 8)
    else:
        tb = B                                # full (tiny) batch in one block
    num_blocks = pl.cdiv(B, tb)

    kernel = lambda *refs: _rbf_kernel(*refs, neg_k=neg_k)

    def _build(params_buffer_count):
        def param_spec(shape):
            if params_buffer_count is None:
                return pl.BlockSpec(shape, lambda i: (0, 0))
            return pl.BlockSpec(shape, lambda i: (0, 0),
                                pipeline_mode=pl.Buffered(params_buffer_count))

        return pl.pallas_call(
            kernel,
            out_shape=jax.ShapeDtypeStruct((B, 3), jnp.float32),
            grid=(num_blocks,),
            in_specs=[
                pl.BlockSpec((tb, D), lambda i: (i, 0)),  # x: tiled over batch
                param_spec((D, C)),                       # centers^T / sigma^2
                param_spec((1, C)),                       # -||c||^2/(2 sigma^2)
                param_spec((C, 3)),                       # linear weight (pre-T)
                param_spec((1, 3)),                       # bias
            ],
            out_specs=pl.BlockSpec((tb, 3), lambda i: (i, 0)),
            compiler_params=pltpu.CompilerParams(
                dimension_semantics=("parallel",),
                vmem_limit_bytes=vmem_limit),
        )

    args = (x, centers_t_scaled, cn_scaled, weight_t, bias)
    try:
        # Single-buffer the loop-invariant params (constant index_map).
        out = _build(1)(*args)
    except Exception:
        # Fallback: default double-buffered pipelining for all inputs.
        out = _build(None)(*args)
    return out


def rbf_layer_ref(x, centers, weight_t, bias, sigma=1.0):
    diff = x[:, None, :] - centers[None, :, :]
    dist = jnp.sum(diff * diff, axis=-1)
    rbf = jnp.exp(-dist / (2.0 * sigma * sigma))
    return rbf @ weight_t + bias


if __name__ == "__main__":
    key = jax.random.PRNGKey(0)
    k1, k2, k3, k4 = jax.random.split(key, 4)

    # Small shapes; batch chosen NOT divisible by the block so the ragged
    # (un-padded) last grid block is exercised.
    batch, input_dim, num_centers, sigma = 60, 32, 16, 1.0

    x = jax.random.normal(k1, (batch, input_dim), dtype=jnp.float32)
    centers = jax.random.normal(k2, (num_centers, input_dim), dtype=jnp.float32)
    # nn.Linear(num_centers, 3): weight (3, C) stored pre-transposed as (C, 3).
    bound = float(num_centers) ** -0.5
    weight_t = jax.random.uniform(
        k3, (num_centers, 3), minval=-bound, maxval=bound, dtype=jnp.float32)
    bias = jax.random.uniform(
        k4, (1, 3), minval=-bound, maxval=bound, dtype=jnp.float32)

    # Small max_rows_per_block so multiple grid steps + a partial tile run.
    out = rbf_layer(x, centers, weight_t, bias, sigma, max_rows_per_block=16)
    out = jax.block_until_ready(out)

    ref = rbf_layer_ref(x, centers, weight_t, bias, sigma)
    assert out.shape == (batch, 3)
    assert jnp.allclose(out, ref, atol=1e-4, rtol=1e-4), (out, ref)

    print("KERNEL_OK")
</pallas_src>

<mosaic_0001>
module attributes {stable_mosaic.version = 11 : i64} {
  func.func @_lambda_(%arg0: i32, %arg1: memref<16x32xf32, #tpu.memory_space<vmem>>, %arg2: memref<32x16xf32, #tpu.memory_space<vmem>>, %arg3: memref<1x16xf32, #tpu.memory_space<vmem>>, %arg4: memref<16x3xf32, #tpu.memory_space<vmem>>, %arg5: memref<1x3xf32, #tpu.memory_space<vmem>>, %arg6: memref<16x3xf32, #tpu.memory_space<vmem>>) attributes {dimension_semantics = [#tpu.dimension_semantics<parallel>], iteration_bounds = array<i64: 4>, scalar_prefetch = 0 : i64, scratch_operands = 0 : i64, tpu.core_type = #tpu.core_type<tc>, window_params = [{transform_indices = @transform_0, window_bounds = array<i64: 16, 32>}, {pipeline_mode = #tpu.pipeline_mode<synchronous>, transform_indices = @transform_1, window_bounds = array<i64: 32, 16>}, {pipeline_mode = #tpu.pipeline_mode<synchronous>, transform_indices = @transform_2, window_bounds = array<i64: 1, 16>}, {pipeline_mode = #tpu.pipeline_mode<synchronous>, transform_indices = @transform_3, window_bounds = array<i64: 16, 3>}, {pipeline_mode = #tpu.pipeline_mode<synchronous>, transform_indices = @transform_4, window_bounds = array<i64: 1, 3>}, {transform_indices = @transform_5, window_bounds = array<i64: 16, 3>}]} {
    %c0 = arith.constant 0 : index
    %c0_0 = arith.constant 0 : index
    %0 = vector.load %arg1[%c0, %c0_0] : memref<16x32xf32, #tpu.memory_space<vmem>>, vector<16x32xf32>
    %1 = arith.mulf %0, %0 : vector<16x32xf32>
    %cst = arith.constant dense<0.000000e+00> : vector<16xf32>
    %2 = vector.multi_reduction <add>, %1, %cst [1] : vector<16x32xf32> to vector<16xf32>
    %3 = vector.shape_cast %2 : vector<16xf32> to vector<16x1xf32>
    %cst_1 = arith.constant -5.000000e-01 : f32
    %4 = vector.broadcast %cst_1 : f32 to vector<16x1xf32>
    %5 = arith.mulf %4, %3 : vector<16x1xf32>
    %c0_2 = arith.constant 0 : index
    %c0_3 = arith.constant 0 : index
    %6 = vector.load %arg2[%c0_2, %c0_3] : memref<32x16xf32, #tpu.memory_space<vmem>>, vector<32x16xf32>
    %cst_4 = arith.constant dense<0.000000e+00> : vector<16x16xf32>
    %7 = tpu.matmul %0, %6, %cst_4 {dimension_numbers = #tpu.dot_dimension_numbers<[1], [0], [0], [1], [0, 0, 1, 1], [], []>} : vector<16x32xf32>, vector<32x16xf32>, vector<16x16xf32> -> vector<16x16xf32>
    %c0_5 = arith.constant 0 : index
    %c0_6 = arith.constant 0 : index
    %8 = vector.load %arg3[%c0_5, %c0_6] : memref<1x16xf32, #tpu.memory_space<vmem>>, vector<1x16xf32>
    %9 = vector.broadcast %8 : vector<1x16xf32> to vector<16x16xf32>
    %10 = arith.addf %7, %9 : vector<16x16xf32>
    %11 = vector.broadcast %5 : vector<16x1xf32> to vector<16x16xf32>
    %12 = arith.addf %10, %11 : vector<16x16xf32>
    %13 = math.exp %12 : vector<16x16xf32>
    %c0_7 = arith.constant 0 : index
    %c0_8 = arith.constant 0 : index
    %14 = vector.load %arg4[%c0_7, %c0_8] : memref<16x3xf32, #tpu.memory_space<vmem>>, vector<16x3xf32>
    %cst_9 = arith.constant dense<0.000000e+00> : vector<16x3xf32>
    %15 = tpu.matmul %13, %14, %cst_9 {dimension_numbers = #tpu.dot_dimension_numbers<[1], [0], [0], [1], [0, 0, 1, 1], [], []>} : vector<16x16xf32>, vector<16x3xf32>, vector<16x3xf32> -> vector<16x3xf32>
    %c0_10 = arith.constant 0 : index
    %c0_11 = arith.constant 0 : index
    %16 = vector.load %arg5[%c0_10, %c0_11] : memref<1x3xf32, #tpu.memory_space<vmem>>, vector<1x3xf32>
    %17 = vector.broadcast %16 : vector<1x3xf32> to vector<16x3xf32>
    %18 = arith.addf %15, %17 : vector<16x3xf32>
    %c0_12 = arith.constant 0 : index
    %c0_13 = arith.constant 0 : index
    %19 = vector.load %arg6[%c0_12, %c0_13] : memref<16x3xf32, #tpu.memory_space<vmem>>, vector<16x3xf32>
    tpu.vector_store %arg6[%c0_12, %c0_13], %18 {strides = array<i32>} : memref<16x3xf32, #tpu.memory_space<vmem>>, vector<16x3xf32>,
    return
  }
  func.func @transform_0(%arg0: i32) -> (i32, i32) {
    %c0_i32 = arith.constant 0 : i32
    %c0_i32_0 = arith.constant 0 : i32
    return %arg0, %c0_i32 : i32, i32
  }
  func.func @transform_1(%arg0: i32) -> (i32, i32) {
    %c0_i32 = arith.constant 0 : i32
    %c0_i32_0 = arith.constant 0 : i32
    %c0_i32_1 = arith.constant 0 : i32
    return %c0_i32, %c0_i32_0 : i32, i32
  }
  func.func @transform_2(%arg0: i32) -> (i32, i32) {
    %c0_i32 = arith.constant 0 : i32
    %c0_i32_0 = arith.constant 0 : i32
    %c0_i32_1 = arith.constant 0 : i32
    return %c0_i32, %c0_i32_0 : i32, i32
  }
  func.func @transform_3(%arg0: i32) -> (i32, i32) {
    %c0_i32 = arith.constant 0 : i32
    %c0_i32_0 = arith.constant 0 : i32
    %c0_i32_1 = arith.constant 0 : i32
    return %c0_i32, %c0_i32_0 : i32, i32
  }
  func.func @transform_4(%arg0: i32) -> (i32, i32) {
    %c0_i32 = arith.constant 0 : i32
    %c0_i32_0 = arith.constant 0 : i32
    %c0_i32_1 = arith.constant 0 : i32
    return %c0_i32, %c0_i32_0 : i32, i32
  }
  func.func @transform_5(%arg0: i32) -> (i32, i32) {
    %c0_i32 = arith.constant 0 : i32
    %c0_i32_0 = arith.constant 0 : i32
    return %arg0, %c0_i32 : i32, i32
  }
}

module attributes {stable_mosaic.version = 11 : i64} {
  func.func @_lambda_(%arg0: i32, %arg1: memref<16x32xf32, #tpu.memory_space<vmem>>, %arg2: memref<32x16xf32, #tpu.memory_space<vmem>>, %arg3: memref<1x16xf32, #tpu.memory_space<vmem>>, %arg4: memref<16x3xf32, #tpu.memory_space<vmem>>, %arg5: memref<1x3xf32, #tpu.memory_space<vmem>>, %arg6: memref<16x3xf32, #tpu.memory_space<vmem>>) attributes {dimension_semantics = [#tpu.dimension_semantics<parallel>], iteration_bounds = array<i64: 4>, scalar_prefetch = 0 : i64, scratch_operands = 0 : i64, tpu.core_type = #tpu.core_type<tc>, window_params = [{transform_indices = @transform_0, window_bounds = array<i64: 16, 32>}, {pipeline_mode = #tpu.pipeline_mode<synchronous>, transform_indices = @transform_1, window_bounds = array<i64: 32, 16>}, {pipeline_mode = #tpu.pipeline_mode<synchronous>, transform_indices = @transform_2, window_bounds = array<i64: 1, 16>}, {pipeline_mode = #tpu.pipeline_mode<synchronous>, transform_indices = @transform_3, window_bounds = array<i64: 16, 3>}, {pipeline_mode = #tpu.pipeline_mode<synchronous>, transform_indices = @transform_4, window_bounds = array<i64: 1, 3>}, {transform_indices = @transform_5, window_bounds = array<i64: 16, 3>}]} {
    %c0 = arith.constant 0 : index
    %c0_0 = arith.constant 0 : index
    %0 = vector.load %arg1[%c0, %c0_0] : memref<16x32xf32, #tpu.memory_space<vmem>>, vector<16x32xf32>
    %1 = arith.mulf %0, %0 : vector<16x32xf32>
    %cst = arith.constant dense<0.000000e+00> : vector<16xf32>
    %2 = vector.multi_reduction <add>, %1, %cst [1] : vector<16x32xf32> to vector<16xf32>
    %3 = vector.shape_cast %2 : vector<16xf32> to vector<16x1xf32>
    %cst_1 = arith.constant -5.000000e-01 : f32
    %4 = vector.broadcast %cst_1 : f32 to vector<16x1xf32>
    %5 = arith.mulf %4, %3 : vector<16x1xf32>
    %c0_2 = arith.constant 0 : index
    %c0_3 = arith.constant 0 : index
    %6 = vector.load %arg2[%c0_2, %c0_3] : memref<32x16xf32, #tpu.memory_space<vmem>>, vector<32x16xf32>
    %cst_4 = arith.constant dense<0.000000e+00> : vector<16x16xf32>
    %7 = tpu.matmul %0, %6, %cst_4 {dimension_numbers = #tpu.dot_dimension_numbers<[1], [0], [0], [1], [0, 0, 1, 1], [], []>} : vector<16x32xf32>, vector<32x16xf32>, vector<16x16xf32> -> vector<16x16xf32>
    %c0_5 = arith.constant 0 : index
    %c0_6 = arith.constant 0 : index
    %8 = vector.load %arg3[%c0_5, %c0_6] : memref<1x16xf32, #tpu.memory_space<vmem>>, vector<1x16xf32>
    %9 = vector.broadcast %8 : vector<1x16xf32> to vector<16x16xf32>
    %10 = arith.addf %7, %9 : vector<16x16xf32>
    %11 = vector.broadcast %5 : vector<16x1xf32> to vector<16x16xf32>
    %12 = arith.addf %10, %11 : vector<16x16xf32>
    %13 = math.exp %12 : vector<16x16xf32>
    %c0_7 = arith.constant 0 : index
    %c0_8 = arith.constant 0 : index
    %14 = vector.load %arg4[%c0_7, %c0_8] : memref<16x3xf32, #tpu.memory_space<vmem>>, vector<16x3xf32>
    %cst_9 = arith.constant dense<0.000000e+00> : vector<16x3xf32>
    %15 = tpu.matmul %13, %14, %cst_9 {dimension_numbers = #tpu.dot_dimension_numbers<[1], [0], [0], [1], [0, 0, 1, 1], [], []>} : vector<16x16xf32>, vector<16x3xf32>, vector<16x3xf32> -> vector<16x3xf32>
    %c0_10 = arith.constant 0 : index
    %c0_11 = arith.constant 0 : index
    %16 = vector.load %arg5[%c0_10, %c0_11] : memref<1x3xf32, #tpu.memory_space<vmem>>, vector<1x3xf32>
    %17 = vector.broadcast %16 : vector<1x3xf32> to vector<16x3xf32>
    %18 = arith.addf %15, %17 : vector<16x3xf32>
    %c0_12 = arith.constant 0 : index
    %c0_13 = arith.constant 0 : index
    %19 = vector.load %arg6[%c0_12, %c0_13] : memref<16x3xf32, #tpu.memory_space<vmem>>, vector<16x3xf32>
    tpu.vector_store %arg6[%c0_12, %c0_13], %18 {strides = array<i32>} : memref<16x3xf32, #tpu.memory_space<vmem>>, vector<16x3xf32>,
    return
  }
  func.func @transform_0(%arg0: i32) -> (i32, i32) {
    %c0_i32 = arith.constant 0 : i32
    %c0_i32_0 = arith.constant 0 : i32
    return %arg0, %c0_i32 : i32, i32
  }
  func.func @transform_1(%arg0: i32) -> (i32, i32) {
    %c0_i32 = arith.constant 0 : i32
    %c0_i32_0 = arith.constant 0 : i32
    %c0_i32_1 = arith.constant 0 : i32
    return %c0_i32, %c0_i32_0 : i32, i32
  }
  func.func @transform_2(%arg0: i32) -> (i32, i32) {
    %c0_i32 = arith.constant 0 : i32
    %c0_i32_0 = arith.constant 0 : i32
    %c0_i32_1 = arith.constant 0 : i32
    return %c0_i32, %c0_i32_0 : i32, i32
  }
  func.func @transform_3(%arg0: i32) -> (i32, i32) {
    %c0_i32 = arith.constant 0 : i32
    %c0_i32_0 = arith.constant 0 : i32
    %c0_i32_1 = arith.constant 0 : i32
    return %c0_i32, %c0_i32_0 : i32, i32
  }
  func.func @transform_4(%arg0: i32) -> (i32, i32) {
    %c0_i32 = arith.constant 0 : i32
    %c0_i32_0 = arith.constant 0 : i32
    %c0_i32_1 = arith.constant 0 : i32
    return %c0_i32, %c0_i32_0 : i32, i32
  }
  func.func @transform_5(%arg0: i32) -> (i32, i32) {
    %c0_i32 = arith.constant 0 : i32
    %c0_i32_0 = arith.constant 0 : i32
    return %arg0, %c0_i32 : i32, i32
  }
}

</mosaic_0001>

<llo_original>
// kernel: tpu_custom_call.1
$region0: #{tpu_custom_call.1}
  #allocation0 [shape = 'u32[]', space=smem, size = 0x4, offset = 0x4, fixed_abs, tag = 'smem constant byte address 0x4 - core index']
  #allocation1 [shape = 'u32[144,128]{1,0:T(1,128)}', space=vmem, size = 0x12000, scoped, tag = 'internal scratch']
  %s0 = inlined_call_operand.vmem [shape: f32[60,32], index: 0, kind: input, shape index: {}]
  %s1 = inlined_call_operand.vmem [shape: f32[32,16], index: 1, kind: input, shape index: {}]
  %s2 = inlined_call_operand.vmem [shape: f32[1,16], index: 2, kind: input, shape index: {}]
  %s3 = inlined_call_operand.vmem [shape: f32[16,3], index: 3, kind: input, shape index: {}]
  %s4 = inlined_call_operand.vmem [shape: f32[1,3], index: 4, kind: input, shape index: {}]
  %s5 = inlined_call_operand.vmem [shape: f32[60,3], index: 5, kind: output, shape index: {}]
  %s6 = sld [smem:[#allocation0]]
  $region53: #{tpu_custom_call.1} parent=0
    _
  %s8 = ssub.s32 1, %s6
  %s9 = scalar_select 0, %s8, %s6
  loop: start=0, step=1, limit=6
  $region2: #{tpu_custom_call.1} parent=0 // loop_pre_header
    _
  $region3: #{tpu_custom_call.1} parent=0 // loop_header
    %s11 = sphi 0, %s15
    %p12 = scmp.ge.s32.totalorder %s11, 6
    %s21 = sphi 0, %s23
    %s24 = sphi 0, %s21
    %s25 = sphi 0, %s24
    %s41 = sphi 0, %s25
    %s45 = sphi 0, %s45
    %s47 = sphi 0, %s45
    %s48 = sphi 0, %s47
    %s62 = sphi 0, %s48
    %s66 = sphi 0, %s66
    %s68 = sphi 0, %s66
    %s69 = sphi 0, %s68
    %s83 = sphi 0, %s69
    %s87 = sphi 0, %s87
    %s89 = sphi 0, %s87
    %s90 = sphi 0, %s89
    %s104 = sphi 0, %s90
    %s108 = sphi 0, %s108
    %s110 = sphi 0, %s108
    %s111 = sphi 0, %s110
    %s125 = sphi 0, %s111
    %s131 = sphi 0, %s133
    %s134 = sphi 0, %s131
    %s135 = sphi 0, %s134
    %s151 = sphi 0, %s135
  $region4: #{tpu_custom_call.1} parent=0 // loop_header_branch
    %14 = sbr.rel (%p12) target = $region8
  $region5: #{tpu_custom_call.1} parent=0 // loop_body
    %s16 = ssub.s32 %s11, 1
    %s17 = ssub.s32 %s11, 2
    %s18 = sadd.s32 %s11, 1
    %s19 = ssub.s32 %s11, %s18
    %p20 = scmp.eq.s32.totalorder %s19, 0
    %s22 = sadd.s32 %s21, 1
    %s23 = scalar_select %p20, %s21, %s22
    %p26 = pneg %p20
    %p27 = scmp.eq.s32.totalorder %s11, 3
    %p28 = por %p26, %p27
    %p29 = scmp.ne.s32.totalorder %s21, %s24
    %p30 = scmp.eq.s32.totalorder %s11, 0
    %p31 = por %p29, %p30
    %p32 = scmp.ne.s32.totalorder %s21, %s24
    %p33 = scmp.eq.s32.totalorder %s16, 3
    %p34 = por %p32, %p33
    %p35 = scmp.ne.s32.totalorder %s24, %s25
    %p36 = scmp.eq.s32.totalorder %s16, 0
    %p37 = por %p35, %p36
    %p38 = scmp.ne.s32.totalorder %s24, %s25
    %p39 = scmp.eq.s32.totalorder %s17, 3
    %p40 = por %p38, %p39
    %p42 = scmp.ne.s32.totalorder %s25, %s41
    %p43 = scmp.eq.s32.totalorder %s17, 0
    %p44 = por %p42, %p43
    %s46 = sadd.s32 %s45, 1
    %p49 = scmp.eq.s32.totalorder %s11, 3
    %p50 = scmp.ne.s32.totalorder %s45, %s47
    %p51 = scmp.eq.s32.totalorder %s11, 0
    %p52 = por %p50, %p51
    %p53 = scmp.ne.s32.totalorder %s45, %s47
    %p54 = scmp.eq.s32.totalorder %s16, 3
    %p55 = por %p53, %p54
    %p56 = scmp.ne.s32.totalorder %s47, %s48
    %p57 = scmp.eq.s32.totalorder %s16, 0
    %p58 = por %p56, %p57
    %p59 = scmp.ne.s32.totalorder %s47, %s48
    %p60 = scmp.eq.s32.totalorder %s17, 3
    %p61 = por %p59, %p60
    %p63 = scmp.ne.s32.totalorder %s48, %s62
    %p64 = scmp.eq.s32.totalorder %s17, 0
    %p65 = por %p63, %p64
    %s67 = sadd.s32 %s66, 1
    %p70 = scmp.eq.s32.totalorder %s11, 3
    %p71 = scmp.ne.s32.totalorder %s66, %s68
    %p72 = scmp.eq.s32.totalorder %s11, 0
    %p73 = por %p71, %p72
    %p74 = scmp.ne.s32.totalorder %s66, %s68
    %p75 = scmp.eq.s32.totalorder %s16, 3
    %p76 = por %p74, %p75
    %p77 = scmp.ne.s32.totalorder %s68, %s69
    %p78 = scmp.eq.s32.totalorder %s16, 0
    %p79 = por %p77, %p78
    %p80 = scmp.ne.s32.totalorder %s68, %s69
    %p81 = scmp.eq.s32.totalorder %s17, 3
    %p82 = por %p80, %p81
    %p84 = scmp.ne.s32.totalorder %s69, %s83
    %p85 = scmp.eq.s32.totalorder %s17, 0
    %p86 = por %p84, %p85
    %s88 = sadd.s32 %s87, 1
    %p91 = scmp.eq.s32.totalorder %s11, 3
    %p92 = scmp.ne.s32.totalorder %s87, %s89
    %p93 = scmp.eq.s32.totalorder %s11, 0
    %p94 = por %p92, %p93
    %p95 = scmp.ne.s32.totalorder %s87, %s89
    %p96 = scmp.eq.s32.totalorder %s16, 3
    %p97 = por %p95, %p96
    %p98 = scmp.ne.s32.totalorder %s89, %s90
    %p99 = scmp.eq.s32.totalorder %s16, 0
    %p100 = por %p98, %p99
    %p101 = scmp.ne.s32.totalorder %s89, %s90
    %p102 = scmp.eq.s32.totalorder %s17, 3
    %p103 = por %p101, %p102
    %p105 = scmp.ne.s32.totalorder %s90, %s104
    %p106 = scmp.eq.s32.totalorder %s17, 0
    %p107 = por %p105, %p106
    %s109 = sadd.s32 %s108, 1
    %p112 = scmp.eq.s32.totalorder %s11, 3
    %p113 = scmp.ne.s32.totalorder %s108, %s110
    %p114 = scmp.eq.s32.totalorder %s11, 0
    %p115 = por %p113, %p114
    %p116 = scmp.ne.s32.totalorder %s108, %s110
    %p117 = scmp.eq.s32.totalorder %s16, 3
    %p118 = por %p116, %p117
    %p119 = scmp.ne.s32.totalorder %s110, %s111
    %p120 = scmp.eq.s32.totalorder %s16, 0
    %p121 = por %p119, %p120
    %p122 = scmp.ne.s32.totalorder %s110, %s111
    %p123 = scmp.eq.s32.totalorder %s17, 3
    %p124 = por %p122, %p123
    %p126 = scmp.ne.s32.totalorder %s111, %s125
    %p127 = scmp.eq.s32.totalorder %s17, 0
    %p128 = por %p126, %p127
    %s129 = ssub.s32 %s11, %s18
    %p130 = scmp.eq.s32.totalorder %s129, 0
    %s132 = sadd.s32 %s131, 1
    %s133 = scalar_select %p130, %s131, %s132
    %p136 = pneg %p130
    %p137 = scmp.eq.s32.totalorder %s11, 3
    %p138 = por %p136, %p137
    %p139 = scmp.ne.s32.totalorder %s131, %s134
    %p140 = scmp.eq.s32.totalorder %s11, 0
    %p141 = por %p139, %p140
    %p142 = scmp.ne.s32.totalorder %s131, %s134
    %p143 = scmp.eq.s32.totalorder %s16, 3
    %p144 = por %p142, %p143
    %p145 = scmp.ne.s32.totalorder %s134, %s135
    %p146 = scmp.eq.s32.totalorder %s16, 0
    %p147 = por %p145, %p146
    %p148 = scmp.ne.s32.totalorder %s134, %s135
    %p149 = scmp.eq.s32.totalorder %s17, 3
    %p150 = por %p148, %p149
    %p152 = scmp.ne.s32.totalorder %s135, %s151
    %p153 = scmp.eq.s32.totalorder %s17, 0
    %p154 = por %p152, %p153
    %p155 = scmp.le.s32.totalorder 1, %s11
    %p156 = scmp.lt.s32.totalorder %s11, 5
    %p157 = pnand %p155, %p156
    %p158 = pneg %p157
    // Predicated region
    $region9: #{tpu_custom_call.1} parent=5 // pred_check
      _
    $region10: #{tpu_custom_call.1} parent=5 // pred_check_branch
      %160 = sbr.rel (%p157) target = $region12
    $region11: #{tpu_custom_call.1} parent=5 // pred_region
      %s161 = ssub.s32 %s11, 1
      // Predicated region
      $region13: #{tpu_custom_call.1} parent=11 // pred_check
        %p162 = pneg %p58
      $region14: #{tpu_custom_call.1} parent=11 // pred_check_branch
        %164 = sbr.rel (%p162) target = $region16
      $region15: #{tpu_custom_call.1} parent=11 // pred_region
        _
      $region16: #{tpu_custom_call.1} parent=11 // pred_fallthru
        _
      // Predicated region
      $region17: #{tpu_custom_call.1} parent=11 // pred_check
        %p165 = pneg %p79
      $region18: #{tpu_custom_call.1} parent=11 // pred_check_branch
        %167 = sbr.rel (%p165) target = $region20
      $region19: #{tpu_custom_call.1} parent=11 // pred_region
        _
      $region20: #{tpu_custom_call.1} parent=11 // pred_fallthru
        _
      // Predicated region
      $region21: #{tpu_custom_call.1} parent=11 // pred_check
        %p168 = pneg %p100
      $region22: #{tpu_custom_call.1} parent=11 // pred_check_branch
        %170 = sbr.rel (%p168) target = $region24
      $region23: #{tpu_custom_call.1} parent=11 // pred_region
        _
      $region24: #{tpu_custom_call.1} parent=11 // pred_fallthru
        _
      // Predicated region
      $region25: #{tpu_custom_call.1} parent=11 // pred_check
        %p171 = pneg %p121
      $region26: #{tpu_custom_call.1} parent=11 // pred_check_branch
        %173 = sbr.rel (%p171) target = $region28
      $region27: #{tpu_custom_call.1} parent=11 // pred_region
        _
      $region28: #{tpu_custom_call.1} parent=11 // pred_fallthru
        _
    $region12: #{tpu_custom_call.1} parent=5 // pred_fallthru
      _
    %p174 = scmp.lt.s32.totalorder %s11, 4
    // Predicated region
    $region29: #{tpu_custom_call.1} parent=5 // pred_check
      %p175 = pneg %p174
    $region30: #{tpu_custom_call.1} parent=5 // pred_check_branch
      %177 = sbr.rel (%p175) target = $region32
    $region31: #{tpu_custom_call.1} parent=5 // pred_region
      // Predicated region
      $region33: #{tpu_custom_call.1} parent=31 // pred_check
        %p178 = pneg %p31
      $region34: #{tpu_custom_call.1} parent=31 // pred_check_branch
        %180 = sbr.rel (%p178) target = $region36
      $region35: #{tpu_custom_call.1} parent=31 // pred_region
        %s181 = smul.u32 2, %s11
        %p182 = scmp.lt.s32.totalorder %s181, 7
        %s183 = scalar_select %p182, %s181, 7
        %s184 = smul.addr %s183, 8
        %s185 = scalar_lea.vmem %s0, %s184
        %s186 = smul.u32 2, %s11
      $region36: #{tpu_custom_call.1} parent=31 // pred_fallthru
        _
    $region32: #{tpu_custom_call.1} parent=5 // pred_fallthru
      _
    %p187 = scmp.le.s32.totalorder 1, %s11
    %p188 = scmp.lt.s32.totalorder %s11, 5
    %p189 = pnand %p187, %p188
    %p190 = pneg %p189
    // Predicated region
    $region37: #{tpu_custom_call.1} parent=5 // pred_check
      _
    $region38: #{tpu_custom_call.1} parent=5 // pred_check_branch
      %192 = sbr.rel (%p189) target = $region40
    $region39: #{tpu_custom_call.1} parent=5 // pred_region
      %s193 = ssub.s32 %s11, 1
      %s194 = smul.u32 2, %s16
      %p195 = scmp.lt.s32.totalorder %s194, 7
      %s196 = scalar_select %p195, %s194, 7
      %s197 = smul.addr %s196, 8
      %s198 = scalar_lea.vmem %s0, %s197
      %p199 = pneg %p37
      %p200 = pneg %p34
      %p201 = pneg %p58
      %p202 = pneg %p55
      %p203 = pneg %p79
      %p204 = pneg %p76
      %p205 = pneg %p100
      %p206 = pneg %p97
      %p207 = pneg %p121
      %p208 = pneg %p118
      %p209 = pneg %p147
      %p210 = pneg %p144
      %s211 = smul.u32 2, %s16
      %p212 = scmp.lt.s32.totalorder %s211, 7
      %s213 = scalar_select %p212, %s211, 7
      %s214 = smul.addr %s213, 8
      %s215 = scalar_lea.vmem %s5, %s214
      %s216 = smul.u32 2, %s16
      %p217 = scmp.lt.s32.totalorder %s216, 7
      %s218 = scalar_select %p217, %s216, 7
      %s219 = smul.addr %s218, 8
      %s220 = scalar_lea.vmem %s0, %s219
      %s221 = smul.u32 2, %s16
      %s222 = smul.u32 2, %s16
      %p223 = scmp.lt.s32.totalorder %s222, 7
      %s224 = scalar_select %p223, %s222, 7
      %s225 = smul.addr %s224, 8
      %s226 = scalar_lea.vmem %s5, %s225
      %s227 = smul.u32 2, %s16
      %v228 = vld [vmem:[%s220] sm:$0xff]
      %v229 = vld [vmem:[%s220 + $0x8] sm:$0xff]
      %v230 = vmul.f32 %v228, %v228
      %v231 = vmul.f32 %v229, %v229
      %vm232 = vcmask 261120
      %v233 = vsel %vm232, %v230, 0.0
      %234 = vadd.xlane.f32.xlu0 %v233
      %v235 = vpop.xlane.xlu0 %234
      %v236 = vsel %vm232, %v231, 0.0
      %237 = vadd.xlane.f32.xlu0 %v236
      %v238 = vpop.xlane.xlu0 %237
      %v239 = vmul.f32 %v235, -0.5
      %v240 = vmul.f32 %v238, -0.5
      %v241 = vld [vmem:[%s1] sm:$0xff]
      %v242 = vld [vmem:[%s1 + $0x8] sm:$0xff]
      %v243 = vld [vmem:[%s1 + $0x10] sm:$0xff]
      %v244 = vld [vmem:[%s1 + $0x18] sm:$0xff]
      %v245 = vld [vmem:[%s2] sm:$0x1]
      %v247 = vlaneseq
      %v248 = vshrl.u32 %v247, 7
      %v249 = vsub.s32 0, %v248
      %v250 = vrot.slane %v245, %v249
      %v253 = vsel %vm232, %v228, 0
      %v256 = vsel %vm232, %v229, 0
      %258 = vmatprep.subr.mxu0 0.0
      %259 = vmatpush1.msra.mxu0 %v241
      %260 = vmatprep.subr.mxu0 0.0
      %261 = vmatpush1.msra.mxu0 %v242
      %262 = vmatprep.subr.mxu0 0.0
      %263 = vmatpush1.msra.mxu0 %v243
      %264 = vmatprep.subr.mxu0 0.0
      %265 = vmatpush1.msra.mxu0 %v244
      %266 = vmatprep.subr.mxu0 0.0
      %267 = vmatpush1.msra.mxu0 0.0
      %268 = vmatprep.subr.mxu0 0.0
      %269 = vmatpush1.msra.mxu0 0.0
      %270 = vmatprep.subr.mxu0 0.0
      %271 = vmatpush1.msra.mxu0 0.0
      %272 = vmatprep.subr.mxu0 0.0
      %273 = vmatpush1.msra.mxu0 0.0
      %274 = vmatprep.subr.mxu0 0.0
      %275 = vmatpush1.msra.mxu0 0.0
      %276 = vmatprep.subr.mxu0 0.0
      %277 = vmatpush1.msra.mxu0 0.0
      %278 = vmatprep.subr.mxu0 0.0
      %279 = vmatpush1.msra.mxu0 0.0
      %280 = vmatprep.subr.mxu0 0.0
      %281 = vmatpush1.msra.mxu0 0.0
      %282 = vmatprep.subr.mxu0 0.0
      %283 = vmatpush1.msra.mxu0 0.0
      %284 = vmatprep.subr.mxu0 0.0
      %285 = vmatpush1.msra.mxu0 0.0
      %286 = vmatprep.subr.mxu0 0.0
      %287 = vmatpush1.msra.mxu0 0.0
      %288 = vmatprep.subr.mxu0 0.0
      %289 = vmatpush1.msra.mxu0 0.0
      %290 = vmatprep.subr.mxu0 0.0
      %291 = vmatpush1.msra.mxu0 0.0
      %292 = vmatprep.subr.mxu0 0.0
      %293 = vmatpush1.msra.mxu0 0.0
      %294 = vmatprep.subr.mxu0 0.0
      %295 = vmatpush1.msra.mxu0 0.0
      %296 = vmatprep.subr.mxu0 0.0
      %297 = vmatpush1.msra.mxu0 0.0
      %298 = vmatprep.subr.mxu0 0.0
      %299 = vmatpush1.msra.mxu0 0.0
      %300 = vmatprep.subr.mxu0 0.0
      %301 = vmatpush1.msra.mxu0 0.0
      %302 = vmatprep.subr.mxu0 0.0
      %303 = vmatpush1.msra.mxu0 0.0
      %304 = vmatprep.subr.mxu0 0.0
      %305 = vmatpush1.msra.mxu0 0.0
      %306 = vmatprep.subr.mxu0 0.0
      %307 = vmatpush1.msra.mxu0 0.0
      %308 = vmatprep.subr.mxu0 0.0
      %309 = vmatpush1.msra.mxu0 0.0
      %310 = vmatprep.subr.mxu0 0.0
      %311 = vmatpush1.msra.mxu0 0.0
      %312 = vmatprep.subr.mxu0 0.0
      %313 = vmatpush1.msra.mxu0 0.0
      %314 = vmatprep.subr.mxu0 0.0
      %315 = vmatpush1.msra.mxu0 0.0
      %316 = vmatprep.subr.mxu0 0.0
      %317 = vmatpush1.msra.mxu0 0.0
      %318 = vmatprep.subr.mxu0 0.0
      %319 = vmatpush1.msra.mxu0 0.0
      %320 = vmatprep.subr.mxu0 0.0
      %321 = vmatpush1.msra.mxu0 0.0
      %322 = vmatprep.mubr.f32.mxu0 0.0
      %323 = vmatmul.mubr.f32.gmra.mrb[0].mxu0 %v253
      %v324 = vpop.f32.mrb[0].mxu0
      %v325 = vadd.f32 %v250, %v324
      %v326 = vpop.f32.mrb[0].mxu0
      %327 = vmatprep.mubr.f32.mxu0 0.0
      %328 = vmatmul.mubr.f32.gmra.mrb[0].mxu0 %v256
      %v329 = vpop.f32.mrb[0].mxu0
      %v330 = vadd.f32 %v250, %v329
      %v331 = vpop.f32.mrb[0].mxu0
      %332 = vdwg.mxu0
      %v333 = vadd.f32 %v325, %v239
      %v334 = vadd.f32 %v330, %v240
      %v335 = vmul.f32 %v333, 1.442695
      %v336 = vpow.pop %v335
      %v337 = vmul.f32 %v334, 1.442695
      %v338 = vpow.pop %v337
      %v339 = vld [vmem:[%s3] sm:$0xff]
      %v340 = vld [vmem:[%s3 + $0x8] sm:$0xff]
      %v341 = vld [vmem:[%s4] sm:$0x1]
      %v343 = vlaneseq
      %v344 = vshrl.u32 %v343, 7
      %v345 = vsub.s32 0, %v344
      %v346 = vrot.slane %v341, %v345
      %vm348 = vcmask 130048
      %v350 = vsel %vm348, %v336, 0
      %v353 = vsel %vm348, %v338, 0
      %355 = vmatprep.subr.mxu0 0.0
      %356 = vmatpush1.msra.mxu0 %v339
      %357 = vmatprep.subr.mxu0 0.0
      %358 = vmatpush1.msra.mxu0 %v340
      %359 = vmatprep.subr.mxu0 0.0
      %360 = vmatpush1.msra.mxu0 0.0
      %361 = vmatprep.subr.mxu0 0.0
      %362 = vmatpush1.msra.mxu0 0.0
      %363 = vmatprep.subr.mxu0 0.0
      %364 = vmatpush1.msra.mxu0 0.0
      %365 = vmatprep.subr.mxu0 0.0
      %366 = vmatpush1.msra.mxu0 0.0
      %367 = vmatprep.subr.mxu0 0.0
      %368 = vmatpush1.msra.mxu0 0.0
      %369 = vmatprep.subr.mxu0 0.0
      %370 = vmatpush1.msra.mxu0 0.0
      %371 = vmatprep.subr.mxu0 0.0
      %372 = vmatpush1.msra.mxu0 0.0
      %373 = vmatprep.subr.mxu0 0.0
      %374 = vmatpush1.msra.mxu0 0.0
      %375 = vmatprep.subr.mxu0 0.0
      %376 = vmatpush1.msra.mxu0 0.0
      %377 = vmatprep.subr.mxu0 0.0
      %378 = vmatpush1.msra.mxu0 0.0
      %379 = vmatprep.subr.mxu0 0.0
      %380 = vmatpush1.msra.mxu0 0.0
      %381 = vmatprep.subr.mxu0 0.0
      %382 = vmatpush1.msra.mxu0 0.0
      %383 = vmatprep.subr.mxu0 0.0
      %384 = vmatpush1.msra.mxu0 0.0
      %385 = vmatprep.subr.mxu0 0.0
      %386 = vmatpush1.msra.mxu0 0.0
      %387 = vmatprep.subr.mxu0 0.0
      %388 = vmatpush1.msra.mxu0 0.0
      %389 = vmatprep.subr.mxu0 0.0
      %390 = vmatpush1.msra.mxu0 0.0
      %391 = vmatprep.subr.mxu0 0.0
      %392 = vmatpush1.msra.mxu0 0.0
      %393 = vmatprep.subr.mxu0 0.0
      %394 = vmatpush1.msra.mxu0 0.0
      %395 = vmatprep.subr.mxu0 0.0
      %396 = vmatpush1.msra.mxu0 0.0
      %397 = vmatprep.subr.mxu0 0.0
      %398 = vmatpush1.msra.mxu0 0.0
      %399 = vmatprep.subr.mxu0 0.0
      %400 = vmatpush1.msra.mxu0 0.0
      %401 = vmatprep.subr.mxu0 0.0
      %402 = vmatpush1.msra.mxu0 0.0
      %403 = vmatprep.subr.mxu0 0.0
      %404 = vmatpush1.msra.mxu0 0.0
      %405 = vmatprep.subr.mxu0 0.0
      %406 = vmatpush1.msra.mxu0 0.0
      %407 = vmatprep.subr.mxu0 0.0
      %408 = vmatpush1.msra.mxu0 0.0
      %409 = vmatprep.subr.mxu0 0.0
      %410 = vmatpush1.msra.mxu0 0.0
      %411 = vmatprep.subr.mxu0 0.0
      %412 = vmatpush1.msra.mxu0 0.0
      %413 = vmatprep.subr.mxu0 0.0
      %414 = vmatpush1.msra.mxu0 0.0
      %415 = vmatprep.subr.mxu0 0.0
      %416 = vmatpush1.msra.mxu0 0.0
      %417 = vmatprep.subr.mxu0 0.0
      %418 = vmatpush1.msra.mxu0 0.0
      %419 = vmatprep.mubr.f32.mxu0 0.0
      %420 = vmatmul.mubr.f32.gmra.mrb[0].mxu0 %v350
      %v421 = vpop.f32.mrb[0].mxu0
      %v422 = vadd.f32 %v346, %v421
      %v423 = vpop.f32.mrb[0].mxu0
      %424 = vmatprep.mubr.f32.mxu0 0.0
      %425 = vmatmul.mubr.f32.gmra.mrb[0].mxu0 %v353
      %v426 = vpop.f32.mrb[0].mxu0
      %v427 = vadd.f32 %v346, %v426
      %v428 = vpop.f32.mrb[0].mxu0
      %429 = vdwg.mxu0
      %vm430 = vcmask 23552
      %431 = vst.msk [vmem:[%s226] sm:$0xff] %vm430, %v422
      %432 = vst.msk [vmem:[%s226 + $0x8] sm:$0xff] %vm430, %v427
      %s433 = smul.u32 2, %s16
      %p434 = scmp.lt.s32.totalorder %s433, 7
      %s435 = scalar_select %p434, %s433, 7
      %s436 = smul.addr %s435, 8
      %s437 = scalar_lea.vmem %s5, %s436
      // Predicated region
      $region41: #{tpu_custom_call.1} parent=39 // pred_check
        %p438 = pneg %p144
      $region42: #{tpu_custom_call.1} parent=39 // pred_check_branch
        %440 = sbr.rel (%p438) target = $region44
      $region43: #{tpu_custom_call.1} parent=39 // pred_region
        %s441 = smul.u32 2, %s16
      $region44: #{tpu_custom_call.1} parent=39 // pred_fallthru
        _
    $region40: #{tpu_custom_call.1} parent=5 // pred_fallthru
      _
    %p442 = scmp.le.s32.totalorder 2, %s11
    // Predicated region
    $region45: #{tpu_custom_call.1} parent=5 // pred_check
      %p443 = pneg %p442
    $region46: #{tpu_custom_call.1} parent=5 // pred_check_branch
      %445 = sbr.rel (%p443) target = $region48
    $region47: #{tpu_custom_call.1} parent=5 // pred_region
      %s446 = ssub.s32 %s11, 2
      // Predicated region
      $region49: #{tpu_custom_call.1} parent=47 // pred_check
        %p447 = pneg %p150
      $region50: #{tpu_custom_call.1} parent=47 // pred_check_branch
        %449 = sbr.rel (%p447) target = $region52
      $region51: #{tpu_custom_call.1} parent=47 // pred_region
        %s450 = smul.u32 2, %s17
        %p451 = scmp.lt.s32.totalorder %s450, 7
        %s452 = scalar_select %p451, %s450, 7
        %s453 = smul.addr %s452, 8
        %s454 = scalar_lea.vmem %s5, %s453
      $region52: #{tpu_custom_call.1} parent=47 // pred_fallthru
        _
    $region48: #{tpu_custom_call.1} parent=5 // pred_fallthru
      _
  $region6: #{tpu_custom_call.1} parent=0 // loop_footer
    %s15 = sadd.s32 1, %s11
  $region7: #{tpu_custom_call.1} parent=0 // loop_footer_branch
    %10 = sbr.rel target = $region3
  $region8: #{tpu_custom_call.1} parent=0 // loop_exit
    _

// kernel: tpu_custom_call.1
$region0: #{tpu_custom_call.1}
  #allocation0 [shape = 'u32[]', space=smem, size = 0x4, offset = 0x4, fixed_abs, tag = 'smem constant byte address 0x4 - core index']
  #allocation1 [shape = 'u32[144,128]{1,0:T(1,128)}', space=vmem, size = 0x12000, scoped, tag = 'internal scratch']
  %s0 = inlined_call_operand.vmem [shape: f32[60,32], index: 0, kind: input, shape index: {}]
  %s1 = inlined_call_operand.vmem [shape: f32[32,16], index: 1, kind: input, shape index: {}]
  %s2 = inlined_call_operand.vmem [shape: f32[1,16], index: 2, kind: input, shape index: {}]
  %s3 = inlined_call_operand.vmem [shape: f32[16,3], index: 3, kind: input, shape index: {}]
  %s4 = inlined_call_operand.vmem [shape: f32[1,3], index: 4, kind: input, shape index: {}]
  %s5 = inlined_call_operand.vmem [shape: f32[60,3], index: 5, kind: output, shape index: {}]
  %s6 = sld [smem:[#allocation0]]
  $region53: #{tpu_custom_call.1} parent=0
    _
  %s8 = ssub.s32 1, %s6
  %s9 = scalar_select 0, %s8, %s6
  loop: start=0, step=1, limit=6
  $region2: #{tpu_custom_call.1} parent=0 // loop_pre_header
    _
  $region3: #{tpu_custom_call.1} parent=0 // loop_header
    %s11 = sphi 0, %s15
    %p12 = scmp.ge.s32.totalorder %s11, 6
    %s21 = sphi 0, %s23
    %s24 = sphi 0, %s21
    %s25 = sphi 0, %s24
    %s41 = sphi 0, %s25
    %s45 = sphi 0, %s45
    %s47 = sphi 0, %s45
    %s48 = sphi 0, %s47
    %s62 = sphi 0, %s48
    %s66 = sphi 0, %s66
    %s68 = sphi 0, %s66
    %s69 = sphi 0, %s68
    %s83 = sphi 0, %s69
    %s87 = sphi 0, %s87
    %s89 = sphi 0, %s87
    %s90 = sphi 0, %s89
    %s104 = sphi 0, %s90
    %s108 = sphi 0, %s108
    %s110 = sphi 0, %s108
    %s111 = sphi 0, %s110
    %s125 = sphi 0, %s111
    %s131 = sphi 0, %s133
    %s134 = sphi 0, %s131
    %s135 = sphi 0, %s134
    %s151 = sphi 0, %s135
  $region4: #{tpu_custom_call.1} parent=0 // loop_header_branch
    %14 = sbr.rel (%p12) target = $region8
  $region5: #{tpu_custom_call.1} parent=0 // loop_body
    %s16 = ssub.s32 %s11, 1
    %s17 = ssub.s32 %s11, 2
    %s18 = sadd.s32 %s11, 1
    %s19 = ssub.s32 %s11, %s18
    %p20 = scmp.eq.s32.totalorder %s19, 0
    %s22 = sadd.s32 %s21, 1
    %s23 = scalar_select %p20, %s21, %s22
    %p26 = pneg %p20
    %p27 = scmp.eq.s32.totalorder %s11, 3
    %p28 = por %p26, %p27
    %p29 = scmp.ne.s32.totalorder %s21, %s24
    %p30 = scmp.eq.s32.totalorder %s11, 0
    %p31 = por %p29, %p30
    %p32 = scmp.ne.s32.totalorder %s21, %s24
    %p33 = scmp.eq.s32.totalorder %s16, 3
    %p34 = por %p32, %p33
    %p35 = scmp.ne.s32.totalorder %s24, %s25
    %p36 = scmp.eq.s32.totalorder %s16, 0
    %p37 = por %p35, %p36
    %p38 = scmp.ne.s32.totalorder %s24, %s25
    %p39 = scmp.eq.s32.totalorder %s17, 3
    %p40 = por %p38, %p39
    %p42 = scmp.ne.s32.totalorder %s25, %s41
    %p43 = scmp.eq.s32.totalorder %s17, 0
    %p44 = por %p42, %p43
    %s46 = sadd.s32 %s45, 1
    %p49 = scmp.eq.s32.totalorder %s11, 3
    %p50 = scmp.ne.s32.totalorder %s45, %s47
    %p51 = scmp.eq.s32.totalorder %s11, 0
    %p52 = por %p50, %p51
    %p53 = scmp.ne.s32.totalorder %s45, %s47
    %p54 = scmp.eq.s32.totalorder %s16, 3
    %p55 = por %p53, %p54
    %p56 = scmp.ne.s32.totalorder %s47, %s48
    %p57 = scmp.eq.s32.totalorder %s16, 0
    %p58 = por %p56, %p57
    %p59 = scmp.ne.s32.totalorder %s47, %s48
    %p60 = scmp.eq.s32.totalorder %s17, 3
    %p61 = por %p59, %p60
    %p63 = scmp.ne.s32.totalorder %s48, %s62
    %p64 = scmp.eq.s32.totalorder %s17, 0
    %p65 = por %p63, %p64
    %s67 = sadd.s32 %s66, 1
    %p70 = scmp.eq.s32.totalorder %s11, 3
    %p71 = scmp.ne.s32.totalorder %s66, %s68
    %p72 = scmp.eq.s32.totalorder %s11, 0
    %p73 = por %p71, %p72
    %p74 = scmp.ne.s32.totalorder %s66, %s68
    %p75 = scmp.eq.s32.totalorder %s16, 3
    %p76 = por %p74, %p75
    %p77 = scmp.ne.s32.totalorder %s68, %s69
    %p78 = scmp.eq.s32.totalorder %s16, 0
    %p79 = por %p77, %p78
    %p80 = scmp.ne.s32.totalorder %s68, %s69
    %p81 = scmp.eq.s32.totalorder %s17, 3
    %p82 = por %p80, %p81
    %p84 = scmp.ne.s32.totalorder %s69, %s83
    %p85 = scmp.eq.s32.totalorder %s17, 0
    %p86 = por %p84, %p85
    %s88 = sadd.s32 %s87, 1
    %p91 = scmp.eq.s32.totalorder %s11, 3
    %p92 = scmp.ne.s32.totalorder %s87, %s89
    %p93 = scmp.eq.s32.totalorder %s11, 0
    %p94 = por %p92, %p93
    %p95 = scmp.ne.s32.totalorder %s87, %s89
    %p96 = scmp.eq.s32.totalorder %s16, 3
    %p97 = por %p95, %p96
    %p98 = scmp.ne.s32.totalorder %s89, %s90
    %p99 = scmp.eq.s32.totalorder %s16, 0
    %p100 = por %p98, %p99
    %p101 = scmp.ne.s32.totalorder %s89, %s90
    %p102 = scmp.eq.s32.totalorder %s17, 3
    %p103 = por %p101, %p102
    %p105 = scmp.ne.s32.totalorder %s90, %s104
    %p106 = scmp.eq.s32.totalorder %s17, 0
    %p107 = por %p105, %p106
    %s109 = sadd.s32 %s108, 1
    %p112 = scmp.eq.s32.totalorder %s11, 3
    %p113 = scmp.ne.s32.totalorder %s108, %s110
    %p114 = scmp.eq.s32.totalorder %s11, 0
    %p115 = por %p113, %p114
    %p116 = scmp.ne.s32.totalorder %s108, %s110
    %p117 = scmp.eq.s32.totalorder %s16, 3
    %p118 = por %p116, %p117
    %p119 = scmp.ne.s32.totalorder %s110, %s111
    %p120 = scmp.eq.s32.totalorder %s16, 0
    %p121 = por %p119, %p120
    %p122 = scmp.ne.s32.totalorder %s110, %s111
    %p123 = scmp.eq.s32.totalorder %s17, 3
    %p124 = por %p122, %p123
    %p126 = scmp.ne.s32.totalorder %s111, %s125
    %p127 = scmp.eq.s32.totalorder %s17, 0
    %p128 = por %p126, %p127
    %s129 = ssub.s32 %s11, %s18
    %p130 = scmp.eq.s32.totalorder %s129, 0
    %s132 = sadd.s32 %s131, 1
    %s133 = scalar_select %p130, %s131, %s132
    %p136 = pneg %p130
    %p137 = scmp.eq.s32.totalorder %s11, 3
    %p138 = por %p136, %p137
    %p139 = scmp.ne.s32.totalorder %s131, %s134
    %p140 = scmp.eq.s32.totalorder %s11, 0
    %p141 = por %p139, %p140
    %p142 = scmp.ne.s32.totalorder %s131, %s134
    %p143 = scmp.eq.s32.totalorder %s16, 3
    %p144 = por %p142, %p143
    %p145 = scmp.ne.s32.totalorder %s134, %s135
    %p146 = scmp.eq.s32.totalorder %s16, 0
    %p147 = por %p145, %p146
    %p148 = scmp.ne.s32.totalorder %s134, %s135
    %p149 = scmp.eq.s32.totalorder %s17, 3
    %p150 = por %p148, %p149
    %p152 = scmp.ne.s32.totalorder %s135, %s151
    %p153 = scmp.eq.s32.totalorder %s17, 0
    %p154 = por %p152, %p153
    %p155 = scmp.le.s32.totalorder 1, %s11
    %p156 = scmp.lt.s32.totalorder %s11, 5
    %p157 = pnand %p155, %p156
    %p158 = pneg %p157
    // Predicated region
    $region9: #{tpu_custom_call.1} parent=5 // pred_check
      _
    $region10: #{tpu_custom_call.1} parent=5 // pred_check_branch
      %160 = sbr.rel (%p157) target = $region12
    $region11: #{tpu_custom_call.1} parent=5 // pred_region
      %s161 = ssub.s32 %s11, 1
      // Predicated region
      $region13: #{tpu_custom_call.1} parent=11 // pred_check
        %p162 = pneg %p58
      $region14: #{tpu_custom_call.1} parent=11 // pred_check_branch
        %164 = sbr.rel (%p162) target = $region16
      $region15: #{tpu_custom_call.1} parent=11 // pred_region
        _
      $region16: #{tpu_custom_call.1} parent=11 // pred_fallthru
        _
      // Predicated region
      $region17: #{tpu_custom_call.1} parent=11 // pred_check
        %p165 = pneg %p79
      $region18: #{tpu_custom_call.1} parent=11 // pred_check_branch
        %167 = sbr.rel (%p165) target = $region20
      $region19: #{tpu_custom_call.1} parent=11 // pred_region
        _
      $region20: #{tpu_custom_call.1} parent=11 // pred_fallthru
        _
      // Predicated region
      $region21: #{tpu_custom_call.1} parent=11 // pred_check
        %p168 = pneg %p100
      $region22: #{tpu_custom_call.1} parent=11 // pred_check_branch
        %170 = sbr.rel (%p168) target = $region24
      $region23: #{tpu_custom_call.1} parent=11 // pred_region
        _
      $region24: #{tpu_custom_call.1} parent=11 // pred_fallthru
        _
      // Predicated region
      $region25: #{tpu_custom_call.1} parent=11 // pred_check
        %p171 = pneg %p121
      $region26: #{tpu_custom_call.1} parent=11 // pred_check_branch
        %173 = sbr.rel (%p171) target = $region28
      $region27: #{tpu_custom_call.1} parent=11 // pred_region
        _
      $region28: #{tpu_custom_call.1} parent=11 // pred_fallthru
        _
    $region12: #{tpu_custom_call.1} parent=5 // pred_fallthru
      _
    %p174 = scmp.lt.s32.totalorder %s11, 4
    // Predicated region
    $region29: #{tpu_custom_call.1} parent=5 // pred_check
      %p175 = pneg %p174
    $region30: #{tpu_custom_call.1} parent=5 // pred_check_branch
      %177 = sbr.rel (%p175) target = $region32
    $region31: #{tpu_custom_call.1} parent=5 // pred_region
      // Predicated region
      $region33: #{tpu_custom_call.1} parent=31 // pred_check
        %p178 = pneg %p31
      $region34: #{tpu_custom_call.1} parent=31 // pred_check_branch
        %180 = sbr.rel (%p178) target = $region36
      $region35: #{tpu_custom_call.1} parent=31 // pred_region
        %s181 = smul.u32 2, %s11
        %p182 = scmp.lt.s32.totalorder %s181, 7
        %s183 = scalar_select %p182, %s181, 7
        %s184 = smul.addr %s183, 8
        %s185 = scalar_lea.vmem %s0, %s184
        %s186 = smul.u32 2, %s11
      $region36: #{tpu_custom_call.1} parent=31 // pred_fallthru
        _
    $region32: #{tpu_custom_call.1} parent=5 // pred_fallthru
      _
    %p187 = scmp.le.s32.totalorder 1, %s11
    %p188 = scmp.lt.s32.totalorder %s11, 5
    %p189 = pnand %p187, %p188
    %p190 = pneg %p189
    // Predicated region
    $region37: #{tpu_custom_call.1} parent=5 // pred_check
      _
    $region38: #{tpu_custom_call.1} parent=5 // pred_check_branch
      %192 = sbr.rel (%p189) target = $region40
    $region39: #{tpu_custom_call.1} parent=5 // pred_region
      %s193 = ssub.s32 %s11, 1
      %s194 = smul.u32 2, %s16
      %p195 = scmp.lt.s32.totalorder %s194, 7
      %s196 = scalar_select %p195, %s194, 7
      %s197 = smul.addr %s196, 8
      %s198 = scalar_lea.vmem %s0, %s197
      %p199 = pneg %p37
      %p200 = pneg %p34
      %p201 = pneg %p58
      %p202 = pneg %p55
      %p203 = pneg %p79
      %p204 = pneg %p76
      %p205 = pneg %p100
      %p206 = pneg %p97
      %p207 = pneg %p121
      %p208 = pneg %p118
      %p209 = pneg %p147
      %p210 = pneg %p144
      %s211 = smul.u32 2, %s16
      %p212 = scmp.lt.s32.totalorder %s211, 7
      %s213 = scalar_select %p212, %s211, 7
      %s214 = smul.addr %s213, 8
      %s215 = scalar_lea.vmem %s5, %s214
      %s216 = smul.u32 2, %s16
      %p217 = scmp.lt.s32.totalorder %s216, 7
      %s218 = scalar_select %p217, %s216, 7
      %s219 = smul.addr %s218, 8
      %s220 = scalar_lea.vmem %s0, %s219
      %s221 = smul.u32 2, %s16
      %s222 = smul.u32 2, %s16
      %p223 = scmp.lt.s32.totalorder %s222, 7
      %s224 = scalar_select %p223, %s222, 7
      %s225 = smul.addr %s224, 8
      %s226 = scalar_lea.vmem %s5, %s225
      %s227 = smul.u32 2, %s16
      %v228 = vld [vmem:[%s220] sm:$0xff]
      %v229 = vld [vmem:[%s220 + $0x8] sm:$0xff]
      %v230 = vmul.f32 %v228, %v228
      %v231 = vmul.f32 %v229, %v229
      %vm232 = vcmask 261120
      %v233 = vsel %vm232, %v230, 0.0
      %234 = vadd.xlane.f32.xlu0 %v233
      %v235 = vpop.xlane.xlu0 %234
      %v236 = vsel %vm232, %v231, 0.0
      %237 = vadd.xlane.f32.xlu0 %v236
      %v238 = vpop.xlane.xlu0 %237
      %v239 = vmul.f32 %v235, -0.5
      %v240 = vmul.f32 %v238, -0.5
      %v241 = vld [vmem:[%s1] sm:$0xff]
      %v242 = vld [vmem:[%s1 + $0x8] sm:$0xff]
      %v243 = vld [vmem:[%s1 + $0x10] sm:$0xff]
      %v244 = vld [vmem:[%s1 + $0x18] sm:$0xff]
      %v245 = vld [vmem:[%s2] sm:$0x1]
      %v247 = vlaneseq
      %v248 = vshrl.u32 %v247, 7
      %v249 = vsub.s32 0, %v248
      %v250 = vrot.slane %v245, %v249
      %v253 = vsel %vm232, %v228, 0
      %v256 = vsel %vm232, %v229, 0
      %258 = vmatprep.subr.mxu0 0.0
      %259 = vmatpush1.msra.mxu0 %v241
      %260 = vmatprep.subr.mxu0 0.0
      %261 = vmatpush1.msra.mxu0 %v242
      %262 = vmatprep.subr.mxu0 0.0
      %263 = vmatpush1.msra.mxu0 %v243
      %264 = vmatprep.subr.mxu0 0.0
      %265 = vmatpush1.msra.mxu0 %v244
      %266 = vmatprep.subr.mxu0 0.0
      %267 = vmatpush1.msra.mxu0 0.0
      %268 = vmatprep.subr.mxu0 0.0
      %269 = vmatpush1.msra.mxu0 0.0
      %270 = vmatprep.subr.mxu0 0.0
      %271 = vmatpush1.msra.mxu0 0.0
      %272 = vmatprep.subr.mxu0 0.0
      %273 = vmatpush1.msra.mxu0 0.0
      %274 = vmatprep.subr.mxu0 0.0
      %275 = vmatpush1.msra.mxu0 0.0
      %276 = vmatprep.subr.mxu0 0.0
      %277 = vmatpush1.msra.mxu0 0.0
      %278 = vmatprep.subr.mxu0 0.0
      %279 = vmatpush1.msra.mxu0 0.0
      %280 = vmatprep.subr.mxu0 0.0
      %281 = vmatpush1.msra.mxu0 0.0
      %282 = vmatprep.subr.mxu0 0.0
      %283 = vmatpush1.msra.mxu0 0.0
      %284 = vmatprep.subr.mxu0 0.0
      %285 = vmatpush1.msra.mxu0 0.0
      %286 = vmatprep.subr.mxu0 0.0
      %287 = vmatpush1.msra.mxu0 0.0
      %288 = vmatprep.subr.mxu0 0.0
      %289 = vmatpush1.msra.mxu0 0.0
      %290 = vmatprep.subr.mxu0 0.0
      %291 = vmatpush1.msra.mxu0 0.0
      %292 = vmatprep.subr.mxu0 0.0
      %293 = vmatpush1.msra.mxu0 0.0
      %294 = vmatprep.subr.mxu0 0.0
      %295 = vmatpush1.msra.mxu0 0.0
      %296 = vmatprep.subr.mxu0 0.0
      %297 = vmatpush1.msra.mxu0 0.0
      %298 = vmatprep.subr.mxu0 0.0
      %299 = vmatpush1.msra.mxu0 0.0
      %300 = vmatprep.subr.mxu0 0.0
      %301 = vmatpush1.msra.mxu0 0.0
      %302 = vmatprep.subr.mxu0 0.0
      %303 = vmatpush1.msra.mxu0 0.0
      %304 = vmatprep.subr.mxu0 0.0
      %305 = vmatpush1.msra.mxu0 0.0
      %306 = vmatprep.subr.mxu0 0.0
      %307 = vmatpush1.msra.mxu0 0.0
      %308 = vmatprep.subr.mxu0 0.0
      %309 = vmatpush1.msra.mxu0 0.0
      %310 = vmatprep.subr.mxu0 0.0
      %311 = vmatpush1.msra.mxu0 0.0
      %312 = vmatprep.subr.mxu0 0.0
      %313 = vmatpush1.msra.mxu0 0.0
      %314 = vmatprep.subr.mxu0 0.0
      %315 = vmatpush1.msra.mxu0 0.0
      %316 = vmatprep.subr.mxu0 0.0
      %317 = vmatpush1.msra.mxu0 0.0
      %318 = vmatprep.subr.mxu0 0.0
      %319 = vmatpush1.msra.mxu0 0.0
      %320 = vmatprep.subr.mxu0 0.0
      %321 = vmatpush1.msra.mxu0 0.0
      %322 = vmatprep.mubr.f32.mxu0 0.0
      %323 = vmatmul.mubr.f32.gmra.mrb[0].mxu0 %v253
      %v324 = vpop.f32.mrb[0].mxu0
      %v325 = vadd.f32 %v250, %v324
      %v326 = vpop.f32.mrb[0].mxu0
      %327 = vmatprep.mubr.f32.mxu0 0.0
      %328 = vmatmul.mubr.f32.gmra.mrb[0].mxu0 %v256
      %v329 = vpop.f32.mrb[0].mxu0
      %v330 = vadd.f32 %v250, %v329
      %v331 = vpop.f32.mrb[0].mxu0
      %332 = vdwg.mxu0
      %v333 = vadd.f32 %v325, %v239
      %v334 = vadd.f32 %v330, %v240
      %v335 = vmul.f32 %v333, 1.442695
      %v336 = vpow.pop %v335
      %v337 = vmul.f32 %v334, 1.442695
      %v338 = vpow.pop %v337
      %v339 = vld [vmem:[%s3] sm:$0xff]
      %v340 = vld [vmem:[%s3 + $0x8] sm:$0xff]
      %v341 = vld [vmem:[%s4] sm:$0x1]
      %v343 = vlaneseq
      %v344 = vshrl.u32 %v343, 7
      %v345 = vsub.s32 0, %v344
      %v346 = vrot.slane %v341, %v345
      %vm348 = vcmask 130048
      %v350 = vsel %vm348, %v336, 0
      %v353 = vsel %vm348, %v338, 0
      %355 = vmatprep.subr.mxu0 0.0
      %356 = vmatpush1.msra.mxu0 %v339
      %357 = vmatprep.subr.mxu0 0.0
      %358 = vmatpush1.msra.mxu0 %v340
      %359 = vmatprep.subr.mxu0 0.0
      %360 = vmatpush1.msra.mxu0 0.0
      %361 = vmatprep.subr.mxu0 0.0
      %362 = vmatpush1.msra.mxu0 0.0
      %363 = vmatprep.subr.mxu0 0.0
      %364 = vmatpush1.msra.mxu0 0.0
      %365 = vmatprep.subr.mxu0 0.0
      %366 = vmatpush1.msra.mxu0 0.0
      %367 = vmatprep.subr.mxu0 0.0
      %368 = vmatpush1.msra.mxu0 0.0
      %369 = vmatprep.subr.mxu0 0.0
      %370 = vmatpush1.msra.mxu0 0.0
      %371 = vmatprep.subr.mxu0 0.0
      %372 = vmatpush1.msra.mxu0 0.0
      %373 = vmatprep.subr.mxu0 0.0
      %374 = vmatpush1.msra.mxu0 0.0
      %375 = vmatprep.subr.mxu0 0.0
      %376 = vmatpush1.msra.mxu0 0.0
      %377 = vmatprep.subr.mxu0 0.0
      %378 = vmatpush1.msra.mxu0 0.0
      %379 = vmatprep.subr.mxu0 0.0
      %380 = vmatpush1.msra.mxu0 0.0
      %381 = vmatprep.subr.mxu0 0.0
      %382 = vmatpush1.msra.mxu0 0.0
      %383 = vmatprep.subr.mxu0 0.0
      %384 = vmatpush1.msra.mxu0 0.0
      %385 = vmatprep.subr.mxu0 0.0
      %386 = vmatpush1.msra.mxu0 0.0
      %387 = vmatprep.subr.mxu0 0.0
      %388 = vmatpush1.msra.mxu0 0.0
      %389 = vmatprep.subr.mxu0 0.0
      %390 = vmatpush1.msra.mxu0 0.0
      %391 = vmatprep.subr.mxu0 0.0
      %392 = vmatpush1.msra.mxu0 0.0
      %393 = vmatprep.subr.mxu0 0.0
      %394 = vmatpush1.msra.mxu0 0.0
      %395 = vmatprep.subr.mxu0 0.0
      %396 = vmatpush1.msra.mxu0 0.0
      %397 = vmatprep.subr.mxu0 0.0
      %398 = vmatpush1.msra.mxu0 0.0
      %399 = vmatprep.subr.mxu0 0.0
      %400 = vmatpush1.msra.mxu0 0.0
      %401 = vmatprep.subr.mxu0 0.0
      %402 = vmatpush1.msra.mxu0 0.0
      %403 = vmatprep.subr.mxu0 0.0
      %404 = vmatpush1.msra.mxu0 0.0
      %405 = vmatprep.subr.mxu0 0.0
      %406 = vmatpush1.msra.mxu0 0.0
      %407 = vmatprep.subr.mxu0 0.0
      %408 = vmatpush1.msra.mxu0 0.0
      %409 = vmatprep.subr.mxu0 0.0
      %410 = vmatpush1.msra.mxu0 0.0
      %411 = vmatprep.subr.mxu0 0.0
      %412 = vmatpush1.msra.mxu0 0.0
      %413 = vmatprep.subr.mxu0 0.0
      %414 = vmatpush1.msra.mxu0 0.0
      %415 = vmatprep.subr.mxu0 0.0
      %416 = vmatpush1.msra.mxu0 0.0
      %417 = vmatprep.subr.mxu0 0.0
      %418 = vmatpush1.msra.mxu0 0.0
      %419 = vmatprep.mubr.f32.mxu0 0.0
      %420 = vmatmul.mubr.f32.gmra.mrb[0].mxu0 %v350
      %v421 = vpop.f32.mrb[0].mxu0
      %v422 = vadd.f32 %v346, %v421
      %v423 = vpop.f32.mrb[0].mxu0
      %424 = vmatprep.mubr.f32.mxu0 0.0
      %425 = vmatmul.mubr.f32.gmra.mrb[0].mxu0 %v353
      %v426 = vpop.f32.mrb[0].mxu0
      %v427 = vadd.f32 %v346, %v426
      %v428 = vpop.f32.mrb[0].mxu0
      %429 = vdwg.mxu0
      %vm430 = vcmask 23552
      %431 = vst.msk [vmem:[%s226] sm:$0xff] %vm430, %v422
      %432 = vst.msk [vmem:[%s226 + $0x8] sm:$0xff] %vm430, %v427
      %s433 = smul.u32 2, %s16
      %p434 = scmp.lt.s32.totalorder %s433, 7
      %s435 = scalar_select %p434, %s433, 7
      %s436 = smul.addr %s435, 8
      %s437 = scalar_lea.vmem %s5, %s436
      // Predicated region
      $region41: #{tpu_custom_call.1} parent=39 // pred_check
        %p438 = pneg %p144
      $region42: #{tpu_custom_call.1} parent=39 // pred_check_branch
        %440 = sbr.rel (%p438) target = $region44
      $region43: #{tpu_custom_call.1} parent=39 // pred_region
        %s441 = smul.u32 2, %s16
      $region44: #{tpu_custom_call.1} parent=39 // pred_fallthru
        _
    $region40: #{tpu_custom_call.1} parent=5 // pred_fallthru
      _
    %p442 = scmp.le.s32.totalorder 2, %s11
    // Predicated region
    $region45: #{tpu_custom_call.1} parent=5 // pred_check
      %p443 = pneg %p442
    $region46: #{tpu_custom_call.1} parent=5 // pred_check_branch
      %445 = sbr.rel (%p443) target = $region48
    $region47: #{tpu_custom_call.1} parent=5 // pred_region
      %s446 = ssub.s32 %s11, 2
      // Predicated region
      $region49: #{tpu_custom_call.1} parent=47 // pred_check
        %p447 = pneg %p150
      $region50: #{tpu_custom_call.1} parent=47 // pred_check_branch
        %449 = sbr.rel (%p447) target = $region52
      $region51: #{tpu_custom_call.1} parent=47 // pred_region
        %s450 = smul.u32 2, %s17
        %p451 = scmp.lt.s32.totalorder %s450, 7
        %s452 = scalar_select %p451, %s450, 7
        %s453 = smul.addr %s452, 8
        %s454 = scalar_lea.vmem %s5, %s453
      $region52: #{tpu_custom_call.1} parent=47 // pred_fallthru
        _
    $region48: #{tpu_custom_call.1} parent=5 // pred_fallthru
      _
  $region6: #{tpu_custom_call.1} parent=0 // loop_footer
    %s15 = sadd.s32 1, %s11
  $region7: #{tpu_custom_call.1} parent=0 // loop_footer_branch
    %10 = sbr.rel target = $region3
  $region8: #{tpu_custom_call.1} parent=0 // loop_exit
    _

</llo_original>
